<compile_context>
chip_gen: v7x
topology: tpu7x:2x2x1
jax: 0.10.0
libtpu: 0.0.40
codegen_flags: <defaults>
</compile_context>

<pallas_src>
import jax
import jax.numpy as jnp
from jax.experimental import pallas as pl
from jax.experimental.pallas import tpu as pltpu

LANE = 128


def _round_up(n, m):
    return ((n + m - 1) // m) * m


def _cdiv(a, b):
    return (a + b - 1) // b


def mlp_kernel(x_ref, w1_ref, b1_ref, w2_ref, b2_ref, w3_ref, b3_ref, o_ref):
    w1 = w1_ref[...]                     # (in_dim, Hp)  f32 or bf16
    w2 = w2_ref[...]                     # (Hp, Hp)      f32 or bf16
    x = x_ref[...]                       # (TM, in_dim)  same dtype as w1 (cast in wrapper)

    # fc1 + ReLU: MXU matmul, f32 accumulation, f32 bias/ReLU epilogue (VPU).
    h1 = jnp.dot(x, w1, preferred_element_type=jnp.float32)
    h1 = jnp.maximum(h1 + b1_ref[...], 0.0)

    # fc2 + ReLU.
    h2 = jnp.dot(h1.astype(w2.dtype), w2, preferred_element_type=jnp.float32)
    h2 = jnp.maximum(h2 + b2_ref[...], 0.0)            # (TM, Hp) f32

    # final_layer (out_dim == 1): XLU transpose of h2 (tile-aligned), VPU multiply with the
    # w3 column, sublane reduce -> lane-dense (1, TM) row; unmasked vst, 128x less writeback
    # than the old (TM, 128) broadcast slab.  b3 is a scalar read from SMEM.
    h2t = h2.T                                          # (Hp, TM)
    s = jnp.sum(h2t * w3_ref[...], axis=0, keepdims=True)   # (1, TM) f32
    o_ref[...] = (s + b3_ref[0, 0]).astype(o_ref.dtype)


def _choose_tiling(batch, tm_target):
    """Near-equal 128-aligned batch tiles; even tile count when grid > 1 (v7x dual-TC)."""
    num_tiles = _cdiv(batch, tm_target)
    if num_tiles > 1 and num_tiles % 2 == 1:
        num_tiles += 1                       # even split across v7x's two TensorCores
    tm = _round_up(_cdiv(batch, num_tiles), LANE)   # 128-aligned: lane-dense (1, tm) out block
    return num_tiles, tm


def nn_forward(x, params, *, tm_target=1024, dot_dtype=jnp.bfloat16):
    """Forward pass of NN (fc1->ReLU->fc2->ReLU->final_layer). Returns (B, 1) float32."""
    w1, b1, w2, b2, w3, b3 = params
    B, in_dim = x.shape
    hidden = w1.shape[1]
    hid_p = _round_up(hidden, LANE)      # pad hidden to one 128-lane tile (never to 256)

    # Zero-pad the hidden dim to 128 lanes (numerically exact under matmul + ReLU).
    w1p = jnp.zeros((in_dim, hid_p), jnp.float32).at[:, :hidden].set(w1).astype(dot_dtype)
    b1p = jnp.zeros((1, hid_p), jnp.float32).at[:, :hidden].set(b1)
    w2p = jnp.zeros((hid_p, hid_p), jnp.float32).at[:hidden, :hidden].set(w2).astype(dot_dtype)
    b2p = jnp.zeros((1, hid_p), jnp.float32).at[:, :hidden].set(b2)
    # final-layer weight as an (Hp, 1) column (f32, used on the VPU/XLU path).
    w3p = jnp.zeros((hid_p, 1), jnp.float32).at[:hidden, :].set(w3.reshape(hidden, 1))
    b3p = b3.reshape(1, 1).astype(jnp.float32)          # scalar bias -> SMEM

    num_tiles, tm = _choose_tiling(B, tm_target)
    B_pad = num_tiles * tm
    # Pad the batch and cast inputs to the MXU operand dtype (halves the x DMA for bf16).
    xp = jnp.zeros((B_pad, in_dim), dot_dtype).at[:B].set(x.astype(dot_dtype))

    def resident(shape):
        nd = len(shape)
        return pl.BlockSpec(shape, lambda i: (0,) * nd)   # constant block: VMEM-resident

    out = pl.pallas_call(
        mlp_kernel,
        out_shape=jax.ShapeDtypeStruct((1, B_pad), jnp.float32),
        grid=(num_tiles,),
        in_specs=[
            pl.BlockSpec((tm, in_dim), lambda i: (i, 0)),     # x: batch-tiled, double-buffered
            resident(w1p.shape), resident(b1p.shape),
            resident(w2p.shape), resident(b2p.shape),
            resident(w3p.shape),
            pl.BlockSpec(memory_space=pltpu.MemorySpace.SMEM),  # b3 scalar in SMEM
        ],
        out_specs=pl.BlockSpec((1, tm), lambda i: (0, i)),    # lane-dense transposed output
        compiler_params=pltpu.CompilerParams(dimension_semantics=("parallel",)),
    )(xp, w1p, b1p, w2p, b2p, w3p, b3p)

    # Mandatory slice: padded batch columns contain ReLU(bias)-propagated garbage.
    return out[0, :B].reshape(B, 1)


def init_params(key, in_dim=13, hidden_dim=100):
    # Mimics PyTorch nn.Linear default init (uniform +/- 1/sqrt(fan_in)).
    ks = jax.random.split(key, 6)

    def linear(kw, kb, fan_in, fan_out):
        bound = 1.0 / jnp.sqrt(fan_in)
        # Stored as [fan_in, fan_out] (transposed vs. PyTorch's [out, in]).
        w = jax.random.uniform(kw, (fan_in, fan_out), jnp.float32, -bound, bound)
        b = jax.random.uniform(kb, (1, fan_out), jnp.float32, -bound, bound)
        return w, b

    w1, b1 = linear(ks[0], ks[1], in_dim, hidden_dim)
    w2, b2 = linear(ks[2], ks[3], hidden_dim, hidden_dim)
    w3, b3 = linear(ks[4], ks[5], hidden_dim, 1)
    return (w1, b1, w2, b2, w3, b3)


def nn_forward_ref(x, params):
    w1, b1, w2, b2, w3, b3 = params
    h1 = jnp.maximum(x @ w1 + b1, 0.0)
    h2 = jnp.maximum(h1 @ w2 + b2, 0.0)
    return h2 @ w3 + b3


if __name__ == "__main__":
    key = jax.random.PRNGKey(0)
    k_params, k_x, k_x2 = jax.random.split(key, 3)

    in_dim, hidden_dim, batch = 13, 100, 8
    params = init_params(k_params, in_dim, hidden_dim)
    x = jax.random.normal(k_x, (batch, in_dim), jnp.float32)
    ref = nn_forward_ref(x, params)

    # Default path: bf16 MXU operands with f32 accumulation (looser tolerance).
    out = jax.block_until_ready(nn_forward(x, params))
    assert out.shape == (batch, 1), out.shape
    assert jnp.allclose(out, ref, atol=5e-2, rtol=5e-2), "bf16 mismatch vs reference"

    # f32-operand path (matches reference up to fp reassociation).
    out_f32 = jax.block_until_ready(nn_forward(x, params, dot_dtype=jnp.float32))
    assert out_f32.shape == (batch, 1)
    assert jnp.allclose(out_f32, ref, atol=2e-4, rtol=2e-4), "f32 mismatch vs reference"

    # Multi-tile / ragged-batch path (balanced 128-aligned tiles, even grid, transposed out).
    batch2 = 2500
    x2 = jax.random.normal(k_x2, (batch2, in_dim), jnp.float32)
    ref2 = nn_forward_ref(x2, params)
    out2 = jax.block_until_ready(nn_forward(x2, params, dot_dtype=jnp.float32))
    assert out2.shape == (batch2, 1)
    assert jnp.allclose(out2, ref2, atol=2e-4, rtol=2e-4), "tiled f32 mismatch vs reference"

    out2_bf16 = jax.block_until_ready(nn_forward(x2, params))
    assert out2_bf16.shape == (batch2, 1)
    assert jnp.allclose(out2_bf16, ref2, atol=5e-2, rtol=5e-2), "tiled bf16 mismatch vs reference"

    print("KERNEL_OK")
</pallas_src>

<mosaic_0001>
module attributes {stable_mosaic.version = 11 : i64} {
  func.func @mlp_kernel(%arg0: i32, %arg1: memref<128x13xbf16, #tpu.memory_space<vmem>>, %arg2: memref<13x128xbf16, #tpu.memory_space<vmem>>, %arg3: memref<1x128xf32, #tpu.memory_space<vmem>>, %arg4: memref<128x128xbf16, #tpu.memory_space<vmem>>, %arg5: memref<1x128xf32, #tpu.memory_space<vmem>>, %arg6: memref<128x1xf32, #tpu.memory_space<vmem>>, %arg7: memref<1x1xf32, #tpu.memory_space<smem>>, %arg8: memref<1x128xf32, #tpu.memory_space<vmem>>) attributes {dimension_semantics = [#tpu.dimension_semantics<parallel>], iteration_bounds = array<i64: 1>, scalar_prefetch = 0 : i64, scratch_operands = 0 : i64, tpu.core_type = #tpu.core_type<tc>, window_params = [{transform_indices = @transform_0, window_bounds = array<i64: 128, 13>}, {pipeline_mode = #tpu.pipeline_mode<synchronous>, transform_indices = @transform_1, window_bounds = array<i64: 13, 128>}, {pipeline_mode = #tpu.pipeline_mode<synchronous>, transform_indices = @transform_2, window_bounds = array<i64: 1, 128>}, {pipeline_mode = #tpu.pipeline_mode<synchronous>, transform_indices = @transform_3, window_bounds = array<i64: 128, 128>}, {pipeline_mode = #tpu.pipeline_mode<synchronous>, transform_indices = @transform_4, window_bounds = array<i64: 1, 128>}, {pipeline_mode = #tpu.pipeline_mode<synchronous>, transform_indices = @transform_5, window_bounds = array<i64: 128, 1>}, {transform_indices = @transform_6, window_bounds = array<i64: 1, 1>}, {transform_indices = @transform_7, window_bounds = array<i64: 1, 128>}]} {
    %c0 = arith.constant 0 : index
    %c0_0 = arith.constant 0 : index
    %0 = vector.load %arg2[%c0, %c0_0] : memref<13x128xbf16, #tpu.memory_space<vmem>>, vector<13x128xbf16>
    %c0_1 = arith.constant 0 : index
    %c0_2 = arith.constant 0 : index
    %1 = vector.load %arg4[%c0_1, %c0_2] : memref<128x128xbf16, #tpu.memory_space<vmem>>, vector<128x128xbf16>
    %c0_3 = arith.constant 0 : index
    %c0_4 = arith.constant 0 : index
    %2 = vector.load %arg1[%c0_3, %c0_4] : memref<128x13xbf16, #tpu.memory_space<vmem>>, vector<128x13xbf16>
    %cst = arith.constant dense<0.000000e+00> : vector<128x128xf32>
    %3 = tpu.matmul %2, %0, %cst {dimension_numbers = #tpu.dot_dimension_numbers<[1], [0], [0], [1], [0, 0, 1, 1], [], []>} : vector<128x13xbf16>, vector<13x128xbf16>, vector<128x128xf32> -> vector<128x128xf32>
    %c0_5 = arith.constant 0 : index
    %c0_6 = arith.constant 0 : index
    %4 = vector.load %arg3[%c0_5, %c0_6] : memref<1x128xf32, #tpu.memory_space<vmem>>, vector<1x128xf32>
    %5 = vector.broadcast %4 : vector<1x128xf32> to vector<128x128xf32>
    %6 = arith.addf %3, %5 : vector<128x128xf32>
    %cst_7 = arith.constant 0.000000e+00 : f32
    %7 = vector.broadcast %cst_7 : f32 to vector<128x128xf32>
    %8 = arith.maximumf %6, %7 : vector<128x128xf32>
    %9 = arith.truncf %8 : vector<128x128xf32> to vector<128x128xbf16>
    %cst_8 = arith.constant dense<0.000000e+00> : vector<128x128xf32>
    %10 = tpu.matmul %9, %1, %cst_8 {dimension_numbers = #tpu.dot_dimension_numbers<[1], [0], [0], [1], [0, 0, 1, 1], [], []>} : vector<128x128xbf16>, vector<128x128xbf16>, vector<128x128xf32> -> vector<128x128xf32>
    %c0_9 = arith.constant 0 : index
    %c0_10 = arith.constant 0 : index
    %11 = vector.load %arg5[%c0_9, %c0_10] : memref<1x128xf32, #tpu.memory_space<vmem>>, vector<1x128xf32>
    %12 = vector.broadcast %11 : vector<1x128xf32> to vector<128x128xf32>
    %13 = arith.addf %10, %12 : vector<128x128xf32>
    %cst_11 = arith.constant 0.000000e+00 : f32
    %14 = vector.broadcast %cst_11 : f32 to vector<128x128xf32>
    %15 = arith.maximumf %13, %14 : vector<128x128xf32>
    %16 = tpu.transpose %15, [1, 0] : vector<128x128xf32> -> vector<128x128xf32>
    %c0_12 = arith.constant 0 : index
    %c0_13 = arith.constant 0 : index
    %17 = vector.load %arg6[%c0_12, %c0_13] : memref<128x1xf32, #tpu.memory_space<vmem>>, vector<128x1xf32>
    %18 = vector.broadcast %17 : vector<128x1xf32> to vector<128x128xf32>
    %19 = arith.mulf %16, %18 : vector<128x128xf32>
    %cst_14 = arith.constant dense<0.000000e+00> : vector<128xf32>
    %20 = vector.multi_reduction <add>, %19, %cst_14 [0] : vector<128x128xf32> to vector<128xf32>
    %21 = vector.shape_cast %20 : vector<128xf32> to vector<1x128xf32>
    %c0_15 = arith.constant 0 : index
    %c0_16 = arith.constant 0 : index
    %22 = memref.load %arg7[%c0_15, %c0_16] : memref<1x1xf32, #tpu.memory_space<smem>>
    %23 = vector.broadcast %22 : f32 to vector<1x128xf32>
    %24 = arith.addf %21, %23 : vector<1x128xf32>
    %c0_17 = arith.constant 0 : index
    %c0_18 = arith.constant 0 : index
    %25 = vector.load %arg8[%c0_17, %c0_18] : memref<1x128xf32, #tpu.memory_space<vmem>>, vector<1x128xf32>
    tpu.vector_store %arg8[%c0_17, %c0_18], %24 {strides = array<i32>} : memref<1x128xf32, #tpu.memory_space<vmem>>, vector<1x128xf32>,
    return
  }
  func.func @transform_0(%arg0: i32) -> (i32, i32) {
    %c0_i32 = arith.constant 0 : i32
    %c0_i32_0 = arith.constant 0 : i32
    return %arg0, %c0_i32 : i32, i32
  }
  func.func @transform_1(%arg0: i32) -> (i32, i32) {
    %c0_i32 = arith.constant 0 : i32
    %c0_i32_0 = arith.constant 0 : i32
    %c0_i32_1 = arith.constant 0 : i32
    return %c0_i32, %c0_i32_0 : i32, i32
  }
  func.func @transform_2(%arg0: i32) -> (i32, i32) {
    %c0_i32 = arith.constant 0 : i32
    %c0_i32_0 = arith.constant 0 : i32
    %c0_i32_1 = arith.constant 0 : i32
    return %c0_i32, %c0_i32_0 : i32, i32
  }
  func.func @transform_3(%arg0: i32) -> (i32, i32) {
    %c0_i32 = arith.constant 0 : i32
    %c0_i32_0 = arith.constant 0 : i32
    %c0_i32_1 = arith.constant 0 : i32
    return %c0_i32, %c0_i32_0 : i32, i32
  }
  func.func @transform_4(%arg0: i32) -> (i32, i32) {
    %c0_i32 = arith.constant 0 : i32
    %c0_i32_0 = arith.constant 0 : i32
    %c0_i32_1 = arith.constant 0 : i32
    return %c0_i32, %c0_i32_0 : i32, i32
  }
  func.func @transform_5(%arg0: i32) -> (i32, i32) {
    %c0_i32 = arith.constant 0 : i32
    %c0_i32_0 = arith.constant 0 : i32
    %c0_i32_1 = arith.constant 0 : i32
    return %c0_i32, %c0_i32_0 : i32, i32
  }
  func.func @transform_6(%arg0: i32) -> (i32, i32) {
    %c0_i32 = arith.constant 0 : i32
    %c0_i32_0 = arith.constant 0 : i32
    %c0_i32_1 = arith.constant 0 : i32
    return %c0_i32, %c0_i32_0 : i32, i32
  }
  func.func @transform_7(%arg0: i32) -> (i32, i32) {
    %c0_i32 = arith.constant 0 : i32
    %c0_i32_0 = arith.constant 0 : i32
    return %c0_i32, %arg0 : i32, i32
  }
}

</mosaic_0001>

<llo_original>
// kernel: tpu_custom_call.1
$region0: #{tpu_custom_call.1}
  #allocation0 [shape = 'u32[]', space=smem, size = 0x4, offset = 0x4, fixed_abs, tag = 'smem constant byte address 0x4 - core index']
  #allocation1 [shape = 'u32[144,128]{1,0:T(1,128)}', space=vmem, size = 0x12000, scoped, tag = 'internal scratch']
  #allocation2 [shape = 'f32[1,1]{1,0:T(1,128)S(6)}', space=smem, size = 0x200, scoped, tag = 'scoped memory for tpu_custom_call.1']
  %s0 = inlined_call_operand.vmem [shape: bf16[128,13], index: 0, kind: input, shape index: {}]
  %s1 = inlined_call_operand.vmem [shape: bf16[13,128], index: 1, kind: input, shape index: {}]
  %s2 = inlined_call_operand.vmem [shape: f32[1,128], index: 2, kind: input, shape index: {}]
  %s3 = inlined_call_operand.vmem [shape: bf16[128,128], index: 3, kind: input, shape index: {}]
  %s4 = inlined_call_operand.vmem [shape: f32[1,128], index: 4, kind: input, shape index: {}]
  %s5 = inlined_call_operand.vmem [shape: f32[128,1], index: 5, kind: input, shape index: {}]
  %s6 = inlined_call_operand.<no memory space> [shape: f32[1,1], index: 6, kind: input, shape index: {}]
  %s7 = inlined_call_operand.hbm [shape: f32[1,128], index: 7, kind: output, shape index: {}]
  %s8 = sld [smem:[#allocation0]]
  $region38: #{tpu_custom_call.1} parent=0
    _
  %s10 = ssub.s32 1, %s8
  %s11 = scalar_select 0, %s10, %s8
  %12 = sst [smem:[#allocation2]] %s6
  $region1: #{tpu_custom_call.1} parent=0
    #allocation3 [shape = 'u8[512]{0}', space=vmem, size = 0x400, scoped, tag = 'output window, operand 0, single buffered']
    #allocation4 [shape = 's32[1]{0}', space=sflag, size = 0x4, scoped, tag = 'scoped memory for tpu_custom_call.1']
    %13 = vsyncpa [#allocation4], 0
    // Predicated region
    $region2: #{tpu_custom_call.1} parent=1 // pred_check
      _
    $region3: #{tpu_custom_call.1} parent=1 // pred_check_branch
      %15 = sbr.rel (0) target = $region5
    $region4: #{tpu_custom_call.1} parent=1 // pred_region
      _
    $region5: #{tpu_custom_call.1} parent=1 // pred_fallthru
      _
    // Predicated region
    $region6: #{tpu_custom_call.1} parent=1 // pred_check
      _
    $region7: #{tpu_custom_call.1} parent=1 // pred_check_branch
      %17 = sbr.rel (0) target = $region9
    $region8: #{tpu_custom_call.1} parent=1 // pred_region
      _
    $region9: #{tpu_custom_call.1} parent=1 // pred_fallthru
      _
    // Predicated region
    $region10: #{tpu_custom_call.1} parent=1 // pred_check
      _
    $region11: #{tpu_custom_call.1} parent=1 // pred_check_branch
      %19 = sbr.rel (0) target = $region13
    $region12: #{tpu_custom_call.1} parent=1 // pred_region
      _
    $region13: #{tpu_custom_call.1} parent=1 // pred_fallthru
      _
    // Predicated region
    $region14: #{tpu_custom_call.1} parent=1 // pred_check
      _
    $region15: #{tpu_custom_call.1} parent=1 // pred_check_branch
      %21 = sbr.rel (0) target = $region17
    $region16: #{tpu_custom_call.1} parent=1 // pred_region
      _
    $region17: #{tpu_custom_call.1} parent=1 // pred_fallthru
      _
    // Predicated region
    $region18: #{tpu_custom_call.1} parent=1 // pred_check
      _
    $region19: #{tpu_custom_call.1} parent=1 // pred_check_branch
      %23 = sbr.rel (0) target = $region21
    $region20: #{tpu_custom_call.1} parent=1 // pred_region
      _
    $region21: #{tpu_custom_call.1} parent=1 // pred_fallthru
      _
    // Predicated region
    $region22: #{tpu_custom_call.1} parent=1 // pred_check
      _
    $region23: #{tpu_custom_call.1} parent=1 // pred_check_branch
      %25 = sbr.rel (0) target = $region25
    $region24: #{tpu_custom_call.1} parent=1 // pred_region
      _
    $region25: #{tpu_custom_call.1} parent=1 // pred_fallthru
      _
    // Predicated region
    $region26: #{tpu_custom_call.1} parent=1 // pred_check
      _
    $region27: #{tpu_custom_call.1} parent=1 // pred_check_branch
      %27 = sbr.rel (0) target = $region29
    $region28: #{tpu_custom_call.1} parent=1 // pred_region
      _
    $region29: #{tpu_custom_call.1} parent=1 // pred_fallthru
      _
    %v29 = vld [vmem:[%s1] sm:$0xf]
    %v30 = vld [vmem:[%s1 + $0x4] sm:$0x7]
    %v31 = vld [vmem:[%s3] sm:$0xf]
    %v32 = vld [vmem:[%s3 + $0x4] sm:$0xf]
    %v33 = vld [vmem:[%s3 + $0x8] sm:$0xf]
    %v34 = vld [vmem:[%s3 + $0xc] sm:$0xf]
    %v35 = vld [vmem:[%s3 + $0x10] sm:$0xf]
    %v36 = vld [vmem:[%s3 + $0x14] sm:$0xf]
    %v37 = vld [vmem:[%s3 + $0x18] sm:$0xf]
    %v38 = vld [vmem:[%s3 + $0x1c] sm:$0xf]
    %v39 = vld [vmem:[%s3 + $0x20] sm:$0xf]
    %v40 = vld [vmem:[%s3 + $0x24] sm:$0xf]
    %v41 = vld [vmem:[%s3 + $0x28] sm:$0xf]
    %v42 = vld [vmem:[%s3 + $0x2c] sm:$0xf]
    %v43 = vld [vmem:[%s3 + $0x30] sm:$0xf]
    %v44 = vld [vmem:[%s3 + $0x34] sm:$0xf]
    %v45 = vld [vmem:[%s3 + $0x38] sm:$0xf]
    %v46 = vld [vmem:[%s3 + $0x3c] sm:$0xf]
    %v47 = vld [vmem:[%s0] sm:$0xf]
    %v48 = vld [vmem:[%s0 + $0x4] sm:$0xf]
    %v49 = vld [vmem:[%s0 + $0x8] sm:$0xf]
    %v50 = vld [vmem:[%s0 + $0xc] sm:$0xf]
    %v51 = vld [vmem:[%s0 + $0x10] sm:$0xf]
    %v52 = vld [vmem:[%s0 + $0x14] sm:$0xf]
    %v53 = vld [vmem:[%s0 + $0x18] sm:$0xf]
    %v54 = vld [vmem:[%s0 + $0x1c] sm:$0xf]
    %v55 = vld [vmem:[%s0 + $0x20] sm:$0xf]
    %v56 = vld [vmem:[%s0 + $0x24] sm:$0xf]
    %v57 = vld [vmem:[%s0 + $0x28] sm:$0xf]
    %v58 = vld [vmem:[%s0 + $0x2c] sm:$0xf]
    %v59 = vld [vmem:[%s0 + $0x30] sm:$0xf]
    %v60 = vld [vmem:[%s0 + $0x34] sm:$0xf]
    %v61 = vld [vmem:[%s0 + $0x38] sm:$0xf]
    %v62 = vld [vmem:[%s0 + $0x3c] sm:$0xf]
    %v63 = vld [vmem:[%s2] sm:$0x1]
    %v65 = vlaneseq
    %v66 = vshrl.u32 %v65, 7
    %v67 = vsub.s32 0, %v66
    %v68 = vrot.slane %v63, %v67
    %v86 = vunpack.c.l.b16 %v47
    %v87 = vunpack.c.l.b16 %v48
    %v88 = vunpack.c.l.b16 %v49
    %v89 = vunpack.c.l.b16 %v50
    %v90 = vunpack.c.l.b16 %v51
    %v91 = vunpack.c.l.b16 %v52
    %v92 = vunpack.c.l.b16 %v53
    %v93 = vunpack.c.l.b16 %v54
    %v94 = vunpack.c.l.b16 %v55
    %v95 = vunpack.c.l.b16 %v56
    %v96 = vunpack.c.l.b16 %v57
    %v97 = vunpack.c.l.b16 %v58
    %v98 = vunpack.c.l.b16 %v59
    %v99 = vunpack.c.l.b16 %v60
    %v100 = vunpack.c.l.b16 %v61
    %v101 = vunpack.c.l.b16 %v62
    %v102 = vpack.c.b16 %v87, %v86
    %v103 = vpack.c.b16 %v89, %v88
    %v104 = vpack.c.b16 %v91, %v90
    %v105 = vpack.c.b16 %v93, %v92
    %v106 = vpack.c.b16 %v95, %v94
    %v107 = vpack.c.b16 %v97, %v96
    %v108 = vpack.c.b16 %v99, %v98
    %v109 = vpack.c.b16 %v101, %v100
    %v112 = vunpack.c.l.b16 %v29
    %v113 = vunpack.c.l.b16 %v30
    %v114 = vpack.c.b16 %v113, %v112
    %vm115 = vcmask 105472
    %v117 = vsel %vm115, %v102, 0
    %v120 = vsel %vm115, %v103, 0
    %v123 = vsel %vm115, %v104, 0
    %v126 = vsel %vm115, %v105, 0
    %v129 = vsel %vm115, %v106, 0
    %v132 = vsel %vm115, %v107, 0
    %v135 = vsel %vm115, %v108, 0
    %v138 = vsel %vm115, %v109, 0
    %vm140 = vcmask 1045504
    %vm141 = vcmask 1046528
    %v142 = vsel %vm140, 4294967295, 65535
    %v143 = vsel %vm141, %v142, 0
    %v145 = vand.u32 %v114, %v143
    %147 = vmatprep.subr.bf16.mxu0 0
    %148 = vmatpush1.bf16.msra.mxu0 %v145
    %149 = vmatprep.subr.bf16.mxu0 0
    %150 = vmatpush1.bf16.msra.mxu0 0
    %151 = vmatprep.subr.bf16.mxu0 0
    %152 = vmatpush1.bf16.msra.mxu0 0
    %153 = vmatprep.subr.bf16.mxu0 0
    %154 = vmatpush1.bf16.msra.mxu0 0
    %155 = vmatprep.subr.bf16.mxu0 0
    %156 = vmatpush1.bf16.msra.mxu0 0
    %157 = vmatprep.subr.bf16.mxu0 0
    %158 = vmatpush1.bf16.msra.mxu0 0
    %159 = vmatprep.subr.bf16.mxu0 0
    %160 = vmatpush1.bf16.msra.mxu0 0
    %161 = vmatprep.subr.bf16.mxu0 0
    %162 = vmatpush1.bf16.msra.mxu0 0
    %163 = vmatprep.subr.bf16.mxu0 0
    %164 = vmatpush1.bf16.msra.mxu0 0
    %165 = vmatprep.subr.bf16.mxu0 0
    %166 = vmatpush1.bf16.msra.mxu0 0
    %167 = vmatprep.subr.bf16.mxu0 0
    %168 = vmatpush1.bf16.msra.mxu0 0
    %169 = vmatprep.subr.bf16.mxu0 0
    %170 = vmatpush1.bf16.msra.mxu0 0
    %171 = vmatprep.subr.bf16.mxu0 0
    %172 = vmatpush1.bf16.msra.mxu0 0
    %173 = vmatprep.subr.bf16.mxu0 0
    %174 = vmatpush1.bf16.msra.mxu0 0
    %175 = vmatprep.subr.bf16.mxu0 0
    %176 = vmatpush1.bf16.msra.mxu0 0
    %177 = vmatprep.subr.bf16.mxu0 0
    %178 = vmatpush1.bf16.msra.mxu0 0
    %179 = vmatprep.mubr.bf16.mxu0 0
    %180 = vmatmul.mubr.bf16.gmra.mrb[0].mxu0 %v117
    %v181 = vpop.f32.mrb[0].mxu0
    %v182 = vadd.f32 %v68, %v181
    %v183 = vpop.f32.mrb[0].mxu0
    %v184 = vpop.f32.mrb[0].mxu0
    %v185 = vadd.f32 %v68, %v184
    %v186 = vpop.f32.mrb[0].mxu0
    %187 = vmatprep.mubr.bf16.mxu0 0
    %188 = vmatmul.mubr.bf16.gmra.mrb[0].mxu0 %v120
    %v189 = vpop.f32.mrb[0].mxu0
    %v190 = vadd.f32 %v68, %v189
    %v191 = vpop.f32.mrb[0].mxu0
    %v192 = vpop.f32.mrb[0].mxu0
    %v193 = vadd.f32 %v68, %v192
    %v194 = vpop.f32.mrb[0].mxu0
    %195 = vmatprep.mubr.bf16.mxu0 0
    %196 = vmatmul.mubr.bf16.gmra.mrb[0].mxu0 %v123
    %v197 = vpop.f32.mrb[0].mxu0
    %v198 = vadd.f32 %v68, %v197
    %v199 = vpop.f32.mrb[0].mxu0
    %v200 = vpop.f32.mrb[0].mxu0
    %v201 = vadd.f32 %v68, %v200
    %v202 = vpop.f32.mrb[0].mxu0
    %203 = vmatprep.mubr.bf16.mxu0 0
    %204 = vmatmul.mubr.bf16.gmra.mrb[0].mxu0 %v126
    %v205 = vpop.f32.mrb[0].mxu0
    %v206 = vadd.f32 %v68, %v205
    %v207 = vpop.f32.mrb[0].mxu0
    %v208 = vpop.f32.mrb[0].mxu0
    %v209 = vadd.f32 %v68, %v208
    %v210 = vpop.f32.mrb[0].mxu0
    %211 = vmatprep.mubr.bf16.mxu0 0
    %212 = vmatmul.mubr.bf16.gmra.mrb[0].mxu0 %v129
    %v213 = vpop.f32.mrb[0].mxu0
    %v214 = vadd.f32 %v68, %v213
    %v215 = vpop.f32.mrb[0].mxu0
    %v216 = vpop.f32.mrb[0].mxu0
    %v217 = vadd.f32 %v68, %v216
    %v218 = vpop.f32.mrb[0].mxu0
    %219 = vmatprep.mubr.bf16.mxu0 0
    %220 = vmatmul.mubr.bf16.gmra.mrb[0].mxu0 %v132
    %v221 = vpop.f32.mrb[0].mxu0
    %v222 = vadd.f32 %v68, %v221
    %v223 = vpop.f32.mrb[0].mxu0
    %v224 = vpop.f32.mrb[0].mxu0
    %v225 = vadd.f32 %v68, %v224
    %v226 = vpop.f32.mrb[0].mxu0
    %227 = vmatprep.mubr.bf16.mxu0 0
    %228 = vmatmul.mubr.bf16.gmra.mrb[0].mxu0 %v135
    %v229 = vpop.f32.mrb[0].mxu0
    %v230 = vadd.f32 %v68, %v229
    %v231 = vpop.f32.mrb[0].mxu0
    %v232 = vpop.f32.mrb[0].mxu0
    %v233 = vadd.f32 %v68, %v232
    %v234 = vpop.f32.mrb[0].mxu0
    %235 = vmatprep.mubr.bf16.mxu0 0
    %236 = vmatmul.mubr.bf16.gmra.mrb[0].mxu0 %v138
    %v237 = vpop.f32.mrb[0].mxu0
    %v238 = vadd.f32 %v68, %v237
    %v239 = vpop.f32.mrb[0].mxu0
    %v240 = vpop.f32.mrb[0].mxu0
    %v241 = vadd.f32 %v68, %v240
    %v242 = vpop.f32.mrb[0].mxu0
    %243 = vdwg.mxu0
    %v244 = vmax.f32 %v182, 0.0
    %v245 = vmax.f32 %v185, 0.0
    %v246 = vmax.f32 %v190, 0.0
    %v247 = vmax.f32 %v193, 0.0
    %v248 = vmax.f32 %v198, 0.0
    %v249 = vmax.f32 %v201, 0.0
    %v250 = vmax.f32 %v206, 0.0
    %v251 = vmax.f32 %v209, 0.0
    %v252 = vmax.f32 %v214, 0.0
    %v253 = vmax.f32 %v217, 0.0
    %v254 = vmax.f32 %v222, 0.0
    %v255 = vmax.f32 %v225, 0.0
    %v256 = vmax.f32 %v230, 0.0
    %v257 = vmax.f32 %v233, 0.0
    %v258 = vmax.f32 %v238, 0.0
    %v259 = vmax.f32 %v241, 0.0
    %v260 = vpack.c.bf16 %v245, %v244
    %v261 = vpack.c.bf16 %v247, %v246
    %v262 = vpack.c.bf16 %v249, %v248
    %v263 = vpack.c.bf16 %v251, %v250
    %v264 = vpack.c.bf16 %v253, %v252
    %v265 = vpack.c.bf16 %v255, %v254
    %v266 = vpack.c.bf16 %v257, %v256
    %v267 = vpack.c.bf16 %v259, %v258
    %v268 = vld [vmem:[%s4] sm:$0x1]
    %v270 = vlaneseq
    %v271 = vshrl.u32 %v270, 7
    %v272 = vsub.s32 0, %v271
    %v273 = vrot.slane %v268, %v272
    %v291 = vunpack.c.l.b16 %v31
    %v292 = vunpack.c.l.b16 %v32
    %v293 = vunpack.c.l.b16 %v33
    %v294 = vunpack.c.l.b16 %v34
    %v295 = vunpack.c.l.b16 %v35
    %v296 = vunpack.c.l.b16 %v36
    %v297 = vunpack.c.l.b16 %v37
    %v298 = vunpack.c.l.b16 %v38
    %v299 = vunpack.c.l.b16 %v39
    %v300 = vunpack.c.l.b16 %v40
    %v301 = vunpack.c.l.b16 %v41
    %v302 = vunpack.c.l.b16 %v42
    %v303 = vunpack.c.l.b16 %v43
    %v304 = vunpack.c.l.b16 %v44
    %v305 = vunpack.c.l.b16 %v45
    %v306 = vunpack.c.l.b16 %v46
    %v307 = vpack.c.b16 %v292, %v291
    %v308 = vpack.c.b16 %v294, %v293
    %v309 = vpack.c.b16 %v296, %v295
    %v310 = vpack.c.b16 %v298, %v297
    %v311 = vpack.c.b16 %v300, %v299
    %v312 = vpack.c.b16 %v302, %v301
    %v313 = vpack.c.b16 %v304, %v303
    %v314 = vpack.c.b16 %v306, %v305
    %323 = vmatprep.subr.bf16.mxu0 0
    %324 = vmatpush1.bf16.msra.mxu0 %v307
    %325 = vmatprep.subr.bf16.mxu0 0
    %326 = vmatpush1.bf16.msra.mxu0 %v308
    %327 = vmatprep.subr.bf16.mxu0 0
    %328 = vmatpush1.bf16.msra.mxu0 %v309
    %329 = vmatprep.subr.bf16.mxu0 0
    %330 = vmatpush1.bf16.msra.mxu0 %v310
    %331 = vmatprep.subr.bf16.mxu0 0
    %332 = vmatpush1.bf16.msra.mxu0 %v311
    %333 = vmatprep.subr.bf16.mxu0 0
    %334 = vmatpush1.bf16.msra.mxu0 %v312
    %335 = vmatprep.subr.bf16.mxu0 0
    %336 = vmatpush1.bf16.msra.mxu0 %v313
    %337 = vmatprep.subr.bf16.mxu0 0
    %338 = vmatpush1.bf16.msra.mxu0 %v314
    %339 = vmatprep.subr.bf16.mxu0 0
    %340 = vmatpush1.bf16.msra.mxu0 0
    %341 = vmatprep.subr.bf16.mxu0 0
    %342 = vmatpush1.bf16.msra.mxu0 0
    %343 = vmatprep.subr.bf16.mxu0 0
    %344 = vmatpush1.bf16.msra.mxu0 0
    %345 = vmatprep.subr.bf16.mxu0 0
    %346 = vmatpush1.bf16.msra.mxu0 0
    %347 = vmatprep.subr.bf16.mxu0 0
    %348 = vmatpush1.bf16.msra.mxu0 0
    %349 = vmatprep.subr.bf16.mxu0 0
    %350 = vmatpush1.bf16.msra.mxu0 0
    %351 = vmatprep.subr.bf16.mxu0 0
    %352 = vmatpush1.bf16.msra.mxu0 0
    %353 = vmatprep.subr.bf16.mxu0 0
    %354 = vmatpush1.bf16.msra.mxu0 0
    %355 = vmatprep.mubr.bf16.mxu0 0
    %356 = vmatmul.mubr.bf16.gmra.mrb[0].mxu0 %v260
    %v357 = vpop.f32.mrb[0].mxu0
    %v358 = vadd.f32 %v273, %v357
    %v359 = vpop.f32.mrb[0].mxu0
    %v360 = vpop.f32.mrb[0].mxu0
    %v361 = vadd.f32 %v273, %v360
    %v362 = vpop.f32.mrb[0].mxu0
    %363 = vmatprep.mubr.bf16.mxu0 0
    %364 = vmatmul.mubr.bf16.gmra.mrb[0].mxu0 %v261
    %v365 = vpop.f32.mrb[0].mxu0
    %v366 = vadd.f32 %v273, %v365
    %v367 = vpop.f32.mrb[0].mxu0
    %v368 = vpop.f32.mrb[0].mxu0
    %v369 = vadd.f32 %v273, %v368
    %v370 = vpop.f32.mrb[0].mxu0
    %371 = vmatprep.mubr.bf16.mxu0 0
    %372 = vmatmul.mubr.bf16.gmra.mrb[0].mxu0 %v262
    %v373 = vpop.f32.mrb[0].mxu0
    %v374 = vadd.f32 %v273, %v373
    %v375 = vpop.f32.mrb[0].mxu0
    %v376 = vpop.f32.mrb[0].mxu0
    %v377 = vadd.f32 %v273, %v376
    %v378 = vpop.f32.mrb[0].mxu0
    %379 = vmatprep.mubr.bf16.mxu0 0
    %380 = vmatmul.mubr.bf16.gmra.mrb[0].mxu0 %v263
    %v381 = vpop.f32.mrb[0].mxu0
    %v382 = vadd.f32 %v273, %v381
    %v383 = vpop.f32.mrb[0].mxu0
    %v384 = vpop.f32.mrb[0].mxu0
    %v385 = vadd.f32 %v273, %v384
    %v386 = vpop.f32.mrb[0].mxu0
    %387 = vmatprep.mubr.bf16.mxu0 0
    %388 = vmatmul.mubr.bf16.gmra.mrb[0].mxu0 %v264
    %v389 = vpop.f32.mrb[0].mxu0
    %v390 = vadd.f32 %v273, %v389
    %v391 = vpop.f32.mrb[0].mxu0
    %v392 = vpop.f32.mrb[0].mxu0
    %v393 = vadd.f32 %v273, %v392
    %v394 = vpop.f32.mrb[0].mxu0
    %395 = vmatprep.mubr.bf16.mxu0 0
    %396 = vmatmul.mubr.bf16.gmra.mrb[0].mxu0 %v265
    %v397 = vpop.f32.mrb[0].mxu0
    %v398 = vadd.f32 %v273, %v397
    %v399 = vpop.f32.mrb[0].mxu0
    %v400 = vpop.f32.mrb[0].mxu0
    %v401 = vadd.f32 %v273, %v400
    %v402 = vpop.f32.mrb[0].mxu0
    %403 = vmatprep.mubr.bf16.mxu0 0
    %404 = vmatmul.mubr.bf16.gmra.mrb[0].mxu0 %v266
    %v405 = vpop.f32.mrb[0].mxu0
    %v406 = vadd.f32 %v273, %v405
    %v407 = vpop.f32.mrb[0].mxu0
    %v408 = vpop.f32.mrb[0].mxu0
    %v409 = vadd.f32 %v273, %v408
    %v410 = vpop.f32.mrb[0].mxu0
    %411 = vmatprep.mubr.bf16.mxu0 0
    %412 = vmatmul.mubr.bf16.gmra.mrb[0].mxu0 %v267
    %v413 = vpop.f32.mrb[0].mxu0
    %v414 = vadd.f32 %v273, %v413
    %v415 = vpop.f32.mrb[0].mxu0
    %v416 = vpop.f32.mrb[0].mxu0
    %v417 = vadd.f32 %v273, %v416
    %v418 = vpop.f32.mrb[0].mxu0
    %419 = vdwg.mxu0
    %v420 = vmax.f32 %v358, 0.0
    %v421 = vmax.f32 %v361, 0.0
    %v422 = vmax.f32 %v366, 0.0
    %v423 = vmax.f32 %v369, 0.0
    %v424 = vmax.f32 %v374, 0.0
    %v425 = vmax.f32 %v377, 0.0
    %v426 = vmax.f32 %v382, 0.0
    %v427 = vmax.f32 %v385, 0.0
    %v428 = vmax.f32 %v390, 0.0
    %v429 = vmax.f32 %v393, 0.0
    %v430 = vmax.f32 %v398, 0.0
    %v431 = vmax.f32 %v401, 0.0
    %v432 = vmax.f32 %v406, 0.0
    %v433 = vmax.f32 %v409, 0.0
    %v434 = vmax.f32 %v414, 0.0
    %v435 = vmax.f32 %v417, 0.0
    %436 = vxpose.xlu0.b32.start [1/16] %v420, 128
    %437 = vxpose.xlu0.b32.cont [2/16] %v421, 128
    %438 = vxpose.xlu0.b32.cont [3/16] %v422, 128
    %439 = vxpose.xlu0.b32.cont [4/16] %v423, 128
    %440 = vxpose.xlu0.b32.cont [5/16] %v424, 128
    %441 = vxpose.xlu0.b32.cont [6/16] %v425, 128
    %442 = vxpose.xlu0.b32.cont [7/16] %v426, 128
    %443 = vxpose.xlu0.b32.cont [8/16] %v427, 128
    %444 = vxpose.xlu0.b32.cont [9/16] %v428, 128
    %445 = vxpose.xlu0.b32.cont [10/16] %v429, 128
    %446 = vxpose.xlu0.b32.cont [11/16] %v430, 128
    %447 = vxpose.xlu0.b32.cont [12/16] %v431, 128
    %448 = vxpose.xlu0.b32.cont [13/16] %v432, 128
    %449 = vxpose.xlu0.b32.cont [14/16] %v433, 128
    %450 = vxpose.xlu0.b32.cont [15/16] %v434, 128
    %451 = vxpose.xlu0.b32.end [16/16] %v435, 128
    %v452 = vpop.trf.xlu0
    %v453 = vpop.trf.xlu0
    %v454 = vpop.trf.xlu0
    %v455 = vpop.trf.xlu0
    %v456 = vpop.trf.xlu0
    %v457 = vpop.trf.xlu0
    %v458 = vpop.trf.xlu0
    %v459 = vpop.trf.xlu0
    %v460 = vpop.trf.xlu0
    %v461 = vpop.trf.xlu0
    %v462 = vpop.trf.xlu0
    %v463 = vpop.trf.xlu0
    %v464 = vpop.trf.xlu0
    %v465 = vpop.trf.xlu0
    %v466 = vpop.trf.xlu0
    %v467 = vpop.trf.xlu0
    %v468 = vld [vmem:[%s5] sm:$0xff]
    %v469 = vld [vmem:[%s5 + $0x8] sm:$0xff]
    %v470 = vld [vmem:[%s5 + $0x10] sm:$0xff]
    %v471 = vld [vmem:[%s5 + $0x18] sm:$0xff]
    %v472 = vld [vmem:[%s5 + $0x20] sm:$0xff]
    %v473 = vld [vmem:[%s5 + $0x28] sm:$0xff]
    %v474 = vld [vmem:[%s5 + $0x30] sm:$0xff]
    %v475 = vld [vmem:[%s5 + $0x38] sm:$0xff]
    %v476 = vld [vmem:[%s5 + $0x40] sm:$0xff]
    %v477 = vld [vmem:[%s5 + $0x48] sm:$0xff]
    %v478 = vld [vmem:[%s5 + $0x50] sm:$0xff]
    %v479 = vld [vmem:[%s5 + $0x58] sm:$0xff]
    %v480 = vld [vmem:[%s5 + $0x60] sm:$0xff]
    %v481 = vld [vmem:[%s5 + $0x68] sm:$0xff]
    %v482 = vld [vmem:[%s5 + $0x70] sm:$0xff]
    %v483 = vld [vmem:[%s5 + $0x78] sm:$0xff]
    %485 = vset.pattern.permute.xlu0 0
    %486 = vperm.xlu0 %485, %v468
    %v487 = vpop.permute.xlu0 %486
    %490 = vset.pattern.permute.xlu0 0
    %491 = vperm.xlu0 %490, %v469
    %v492 = vpop.permute.xlu0 %491
    %495 = vset.pattern.permute.xlu0 0
    %496 = vperm.xlu0 %495, %v470
    %v497 = vpop.permute.xlu0 %496
    %500 = vset.pattern.permute.xlu0 0
    %501 = vperm.xlu0 %500, %v471
    %v502 = vpop.permute.xlu0 %501
    %505 = vset.pattern.permute.xlu0 0
    %506 = vperm.xlu0 %505, %v472
    %v507 = vpop.permute.xlu0 %506
    %510 = vset.pattern.permute.xlu0 0
    %511 = vperm.xlu0 %510, %v473
    %v512 = vpop.permute.xlu0 %511
    %515 = vset.pattern.permute.xlu0 0
    %516 = vperm.xlu0 %515, %v474
    %v517 = vpop.permute.xlu0 %516
    %520 = vset.pattern.permute.xlu0 0
    %521 = vperm.xlu0 %520, %v475
    %v522 = vpop.permute.xlu0 %521
    %525 = vset.pattern.permute.xlu0 0
    %526 = vperm.xlu0 %525, %v476
    %v527 = vpop.permute.xlu0 %526
    %530 = vset.pattern.permute.xlu0 0
    %531 = vperm.xlu0 %530, %v477
    %v532 = vpop.permute.xlu0 %531
    %535 = vset.pattern.permute.xlu0 0
    %536 = vperm.xlu0 %535, %v478
    %v537 = vpop.permute.xlu0 %536
    %540 = vset.pattern.permute.xlu0 0
    %541 = vperm.xlu0 %540, %v479
    %v542 = vpop.permute.xlu0 %541
    %545 = vset.pattern.permute.xlu0 0
    %546 = vperm.xlu0 %545, %v480
    %v547 = vpop.permute.xlu0 %546
    %550 = vset.pattern.permute.xlu0 0
    %551 = vperm.xlu0 %550, %v481
    %v552 = vpop.permute.xlu0 %551
    %555 = vset.pattern.permute.xlu0 0
    %556 = vperm.xlu0 %555, %v482
    %v557 = vpop.permute.xlu0 %556
    %560 = vset.pattern.permute.xlu0 0
    %561 = vperm.xlu0 %560, %v483
    %v562 = vpop.permute.xlu0 %561
    %v564 = vmul.f32 %v452, %v487
    %v565 = vmul.f32 %v453, %v492
    %v566 = vmul.f32 %v454, %v497
    %v567 = vmul.f32 %v455, %v502
    %v568 = vmul.f32 %v456, %v507
    %v569 = vmul.f32 %v457, %v512
    %v570 = vmul.f32 %v458, %v517
    %v571 = vmul.f32 %v459, %v522
    %v572 = vmul.f32 %v460, %v527
    %v573 = vmul.f32 %v461, %v532
    %v574 = vmul.f32 %v462, %v537
    %v575 = vmul.f32 %v463, %v542
    %v576 = vmul.f32 %v464, %v547
    %v577 = vmul.f32 %v465, %v552
    %v578 = vmul.f32 %v466, %v557
    %v579 = vmul.f32 %v467, %v562
    %v580 = vadd.f32 %v564, %v565
    %v581 = vadd.f32 %v580, %v566
    %v582 = vadd.f32 %v581, %v567
    %v583 = vadd.f32 %v582, %v568
    %v584 = vadd.f32 %v583, %v569
    %v585 = vadd.f32 %v584, %v570
    %v586 = vadd.f32 %v585, %v571
    %v587 = vadd.f32 %v586, %v572
    %v588 = vadd.f32 %v587, %v573
    %v589 = vadd.f32 %v588, %v574
    %v590 = vadd.f32 %v589, %v575
    %v591 = vadd.f32 %v590, %v576
    %v592 = vadd.f32 %v591, %v577
    %v593 = vadd.f32 %v592, %v578
    %v594 = vadd.f32 %v593, %v579
    %v595 = vrot.slane %v594, 4
    %v596 = vadd.f32 %v594, %v595
    %v597 = vrot.slane %v596, 2
    %v598 = vadd.f32 %v596, %v597
    %v599 = vrot.slane %v598, 1
    %v600 = vadd.f32 %v598, %v599
    %s601 = sld [smem:[#allocation2]]
    %v602 = vstv %s601
    %v603 = vadd.f32 %v600, %v602
    %604 = vst [vmem:[#allocation3] sm:$0x1] %v603
    // Predicated region
    $region30: #{tpu_custom_call.1} parent=1 // pred_check
      _
    $region31: #{tpu_custom_call.1} parent=1 // pred_check_branch
      %606 = sbr.rel (0) target = $region33
    $region32: #{tpu_custom_call.1} parent=1 // pred_region
      %s608 = ssub.s32 16, 16
      %609 = vsyncadd [#allocation4], %s608
      %s611 = sshll.u32 [#allocation3], 4
      %s612 = int_to_ptr.vmem [resolvable:$true] %s611
      %614 = dma.vmem_to_hbm [thread:$0]  %s612, 16, %s7, [#allocation4]
    $region33: #{tpu_custom_call.1} parent=1 // pred_fallthru
      _
    // Predicated region
    $region34: #{tpu_custom_call.1} parent=1 // pred_check
      _
    $region35: #{tpu_custom_call.1} parent=1 // pred_check_branch
      %616 = sbr.rel (0) target = $region37
    $region36: #{tpu_custom_call.1} parent=1 // pred_region
      %617 = dma.done [#allocation4], 16
    $region37: #{tpu_custom_call.1} parent=1 // pred_fallthru
      _
    %618 = vsyncpa [#allocation4], 1

</llo_original>
